<compile_context>
chip_gen: v5e
topology: v5e:2x2
jax: 0.10.0
libtpu: 0.0.40
codegen_flags: <defaults>
</compile_context>

<pallas_src>
import functools

import jax
import jax.numpy as jnp
from jax.experimental import pallas as pl
from jax.experimental.pallas import tpu as pltpu

LANES = 128
_MAX_TM_ROWS = 8192                 # absolute row-tile cap (keeps f32 temporaries bounded)
_TILE_BYTES_PER_INPUT = 2 * 1024 * 1024   # per-input per-buffer DMA tile budget
_VMEM_LIMIT_BYTES = 32 * 1024 * 1024


def _round_up(x, m):
    return ((x + m - 1) // m) * m


def _pu_partials_kernel(x_ref, t_ref, part_ref, *, n_valid, first_edge_tile,
                        n_grid_tiles):
    """Accumulates per-core partial sums of (t, sigmoid(x), t*sigmoid(x))."""
    c = pl.program_id(0)              # core-split ("parallel") axis
    k = pl.program_id(1)              # reduction ("arbitrary") axis
    steps = pl.num_programs(1)
    tile_idx = c * steps + k          # global row-tile index (may exceed array)
    tm = x_ref.shape[0]

    @pl.when(k == 0)
    def _init():
        part_ref[...] = jnp.zeros_like(part_ref)

    x = x_ref[...].astype(jnp.float32)
    t = t_ref[...].astype(jnp.float32)
    # unlabeled_loss(x) = sigmoid(x); positive_loss(x) = 1 - sigmoid(x).
    s = jax.nn.sigmoid(x)

    def accumulate(tv, sv):
        tr = tv.reshape(tm // 8, 8, LANES)
        sr = sv.reshape(tm // 8, 8, LANES)
        part_ref[0, 0] += jnp.sum(tr, axis=0)        # sum(positive)
        part_ref[0, 1] += jnp.sum(sr, axis=0)        # sum(sigmoid(x))
        part_ref[0, 2] += jnp.sum(tr * sr, axis=0)   # sum(positive * sigmoid(x))

    def accumulate_masked():
        # Global element index of every lane in this tile; drop anything that
        # falls beyond n_valid (ragged last block / fully-OOB grid steps /
        # wrapper lane padding).  jnp.where kills NaN/Inf garbage reads.
        ridx = jax.lax.broadcasted_iota(jnp.int32, (tm, LANES), 0)
        lidx = jax.lax.broadcasted_iota(jnp.int32, (tm, LANES), 1)
        gidx = (tile_idx * tm + ridx) * LANES + lidx
        valid = gidx < n_valid
        zero = jnp.zeros_like(s)
        accumulate(jnp.where(valid, t, zero), jnp.where(valid, s, zero))

    if first_edge_tile >= n_grid_tiles:
        # Every tile is fully valid: zero masking overhead on the hot path.
        accumulate(t, s)
    elif first_edge_tile == 0:
        # Every tile touches padding (tiny inputs): always mask.
        accumulate_masked()
    else:
        @pl.when(tile_idx < first_edge_tile)
        def _fast():
            accumulate(t, s)

        @pl.when(tile_idx >= first_edge_tile)
        def _edge():
            accumulate_masked()


def pu_base_loss(output, target, *, beta=0.5, use_abs=True, max_tm=None):
    """Pallas implementation of PUBaseLoss.forward (sigmoid surrogate losses)."""
    assert output.shape == target.shape
    n_valid = int(output.size)
    assert n_valid > 0

    x_flat = output.reshape(-1)
    t_flat = target.reshape(-1)

    item_x = jnp.dtype(output.dtype).itemsize
    item_t = jnp.dtype(target.dtype).itemsize
    # Sublane granularity: 8 (f32), 16 (bf16), 32 (int8/bool) -- keeps packed
    # dtypes on native tile multiples.
    sub = max(8, 32 // max(1, min(item_x, item_t)))
    if max_tm is None:
        max_tm = min(_MAX_TM_ROWS,
                     _TILE_BYTES_PER_INPUT // (LANES * max(item_x, item_t)))
    max_tm = max(sub, (max_tm // sub) * sub)

    rows = pl.cdiv(n_valid, LANES)
    if rows >= max_tm:
        tm = max_tm
        rows_padded = rows            # ragged last block handled by in-kernel mask
    else:
        tm = _round_up(rows, sub)     # small input: one exact block
        rows_padded = tm

    pad = rows_padded * LANES - n_valid
    if pad:
        # TODO(synk): only non-128-aligned (or tiny, sub-one-tile) inputs pay
        # this copy; large lane-aligned tensors reach the kernel with zero
        # wrapper-side padding.
        x_flat = jnp.pad(x_flat, (0, pad))
        t_flat = jnp.pad(t_flat, (0, pad))
    x2d = x_flat.reshape(rows_padded, LANES)
    t2d = t_flat.reshape(rows_padded, LANES)

    n_row_blocks = pl.cdiv(rows_padded, tm)
    n_cores = 2 if n_row_blocks >= 2 else 1        # v7x: one slice per TensorCore
    steps = pl.cdiv(n_row_blocks, n_cores)
    n_grid_tiles = n_cores * steps
    first_edge_tile = n_valid // (tm * LANES)      # number of fully-valid tiles

    kernel = functools.partial(
        _pu_partials_kernel,
        n_valid=n_valid,
        first_edge_tile=first_edge_tile,
        n_grid_tiles=n_grid_tiles,
    )

    def in_map(c, k):
        # Clamp so fully-out-of-range grid steps (odd block counts) re-read the
        # last block; their contribution is masked to zero in-kernel.
        return (jnp.minimum(c * steps + k, n_row_blocks - 1), 0)

    partials = pl.pallas_call(
        kernel,
        out_shape=jax.ShapeDtypeStruct((n_cores, 3, 8, LANES), jnp.float32),
        grid_spec=pltpu.PrefetchScalarGridSpec(
            num_scalar_prefetch=0,
            grid=(n_cores, steps),
            in_specs=[
                pl.BlockSpec((tm, LANES), in_map),
                pl.BlockSpec((tm, LANES), in_map),
            ],
            # Per-core accumulator output: same block across the k axis, one
            # block per core along the parallel axis (no shared-scratch race).
            out_specs=pl.BlockSpec((1, 3, 8, LANES), lambda c, k: (c, 0, 0, 0)),
        ),
        compiler_params=pltpu.CompilerParams(
            dimension_semantics=("parallel", "arbitrary"),
            vmem_limit_bytes=_VMEM_LIMIT_BYTES),
    )(x2d, t2d)

    # Tiny finalize on (n_cores, 3, 8, 128) partials.
    sum_t = jnp.sum(partials[:, 0])
    sum_s = jnp.sum(partials[:, 1])
    sum_ts = jnp.sum(partials[:, 2])

    beta = jnp.float32(beta)
    n_positive = jnp.maximum(sum_t, 1.0)
    n_unlabeled = jnp.maximum(jnp.float32(n_valid) - sum_t, 1.0)

    # sum(positive * y_positive)   = sum(t * (1 - s)) = sum_t - sum_ts
    # sum(unlabeled * y_unlabeled) = sum((1 - t) * s) = sum_s - sum_ts
    # sum(positive * y_unlabeled)  = sum_ts
    positive_risk = beta * (sum_t - sum_ts) / n_positive
    negative_risk = (sum_s - sum_ts) / n_unlabeled - beta * sum_ts / n_positive

    if use_abs:
        return positive_risk + jnp.abs(negative_risk)
    return jnp.where(negative_risk < 0.0, -negative_risk,
                     positive_risk + negative_risk)


def pu_base_loss_ref(output, target, *, beta=0.5, use_abs=True):
    """Pure-JAX reference matching the PyTorch forward."""
    output = output.astype(jnp.float32)
    target = target.astype(jnp.float32)
    positive = target
    unlabeled = 1.0 - target
    n_positive = jnp.maximum(jnp.sum(positive), 1.0)
    n_unlabeled = jnp.maximum(jnp.sum(unlabeled), 1.0)
    y_positive = jax.nn.sigmoid(-output)
    y_unlabeled = jax.nn.sigmoid(output)
    positive_risk = jnp.sum(beta * positive * y_positive / n_positive)
    negative_risk = jnp.sum(
        (unlabeled / n_unlabeled - beta * positive / n_positive) * y_unlabeled)
    if use_abs:
        return positive_risk + jnp.abs(negative_risk)
    return jnp.where(negative_risk < 0.0, -negative_risk,
                     positive_risk + negative_risk)


if __name__ == "__main__":
    key = jax.random.PRNGKey(0)
    beta = 0.5

    # (shape, forced max_tm): exercises the aligned fast path, the lane-pad +
    # full-mask path, and the multi-tile 2-core grid with ragged/OOB tiles.
    cases = [
        ((2, 4, 16, 16), None),   # 2048 elems: aligned, single exact tile
        ((2, 3, 15, 16), None),   # 1440 elems: lane padding, always-masked tile
        ((2, 4, 35, 32), 16),     # 8960 elems, tm=16: 2-core grid, ragged + OOB tiles
    ]
    for idx, (shape, forced_tm) in enumerate(cases):
        key, k1, k2 = jax.random.split(key, 3)
        output = jax.random.normal(k1, shape, dtype=jnp.float32)
        target = (jax.random.uniform(k2, shape) > 0.7).astype(jnp.float32)
        for use_abs in (True, False):
            loss = pu_base_loss(output, target, beta=beta, use_abs=use_abs,
                                max_tm=forced_tm)
            loss = jax.block_until_ready(loss)
            ref = pu_base_loss_ref(output, target, beta=beta, use_abs=use_abs)
            assert jnp.allclose(loss, ref, rtol=1e-5, atol=1e-5), (
                idx, use_abs, loss, ref)

    print("KERNEL_OK")
</pallas_src>

<mosaic_0001>
module attributes {stable_mosaic.version = 11 : i64} {
  func.func @_pu_partials_kernel(%arg0: i32, %arg1: i32, %arg2: memref<16x128xf32, #tpu.memory_space<vmem>>, %arg3: memref<16x128xf32, #tpu.memory_space<vmem>>, %arg4: memref<1x3x8x128xf32, #tpu.memory_space<vmem>>) attributes {dimension_semantics = [#tpu.dimension_semantics<parallel>, #tpu.dimension_semantics<arbitrary>], iteration_bounds = array<i64: 1, 1>, scalar_prefetch = 0 : i64, scratch_operands = 0 : i64, tpu.core_type = #tpu.core_type<tc>, window_params = [{transform_indices = @transform_0, window_bounds = array<i64: 16, 128>}, {transform_indices = @transform_1, window_bounds = array<i64: 16, 128>}, {transform_indices = @transform_2, window_bounds = array<i64: 1, 3, 8, 128>}]} {
    %c0_i32 = arith.constant 0 : i32
    %0 = arith.cmpi eq, %arg1, %c0_i32 : i32
    %1 = arith.extui %0 : i1 to i32
    %c0_i32_0 = arith.constant 0 : i32
    %2 = arith.cmpi ne, %1, %c0_i32_0 : i32
    scf.if %2 {
      %cst_29 = arith.constant 0.000000e+00 : f32
      %34 = vector.broadcast %cst_29 : f32 to vector<1x3x8x128xf32>
      %c0_30 = arith.constant 0 : index
      %c0_31 = arith.constant 0 : index
      %c0_32 = arith.constant 0 : index
      %c0_33 = arith.constant 0 : index
      %35 = vector.load %arg4[%c0_30, %c0_31, %c0_32, %c0_33] : memref<1x3x8x128xf32, #tpu.memory_space<vmem>>, vector<1x3x8x128xf32>
      tpu.vector_store %arg4[%c0_30, %c0_31, %c0_32, %c0_33], %34 {strides = array<i32>} : memref<1x3x8x128xf32, #tpu.memory_space<vmem>>, vector<1x3x8x128xf32>,
    } else {
    }
    %c0 = arith.constant 0 : index
    %c0_1 = arith.constant 0 : index
    %3 = vector.load %arg2[%c0, %c0_1] : memref<16x128xf32, #tpu.memory_space<vmem>>, vector<16x128xf32>
    %c0_2 = arith.constant 0 : index
    %c0_3 = arith.constant 0 : index
    %4 = vector.load %arg3[%c0_2, %c0_3] : memref<16x128xf32, #tpu.memory_space<vmem>>, vector<16x128xf32>
    %5 = arith.negf %3 : vector<16x128xf32>
    %6 = math.exp %5 : vector<16x128xf32>
    %cst = arith.constant 1.000000e+00 : f32
    %7 = vector.broadcast %cst : f32 to vector<16x128xf32>
    %8 = arith.addf %7, %6 : vector<16x128xf32>
    %9 = arith.divf %7, %8 : vector<16x128xf32>
    %10 = vector.shape_cast %4 : vector<16x128xf32> to vector<2x8x128xf32>
    %11 = vector.shape_cast %9 : vector<16x128xf32> to vector<2x8x128xf32>
    %c0_4 = arith.constant 0 : index
    %c0_5 = arith.constant 0 : index
    %c0_6 = arith.constant 0 : index
    %c0_7 = arith.constant 0 : index
    %12 = vector.load %arg4[%c0_4, %c0_5, %c0_6, %c0_7] : memref<1x3x8x128xf32, #tpu.memory_space<vmem>>, vector<1x1x8x128xf32>
    %13 = vector.shape_cast %12 : vector<1x1x8x128xf32> to vector<8x128xf32>
    %cst_8 = arith.constant dense<0.000000e+00> : vector<8x128xf32>
    %14 = vector.multi_reduction <add>, %10, %cst_8 [0] : vector<2x8x128xf32> to vector<8x128xf32>
    %15 = arith.addf %13, %14 : vector<8x128xf32>
    %c0_9 = arith.constant 0 : index
    %c0_10 = arith.constant 0 : index
    %c0_11 = arith.constant 0 : index
    %c0_12 = arith.constant 0 : index
    %16 = vector.load %arg4[%c0_9, %c0_10, %c0_11, %c0_12] : memref<1x3x8x128xf32, #tpu.memory_space<vmem>>, vector<1x1x8x128xf32>
    %17 = vector.shape_cast %16 : vector<1x1x8x128xf32> to vector<8x128xf32>
    %18 = vector.shape_cast %15 : vector<8x128xf32> to vector<1x1x8x128xf32>
    tpu.vector_store %arg4[%c0_9, %c0_10, %c0_11, %c0_12], %18 {strides = array<i32>} : memref<1x3x8x128xf32, #tpu.memory_space<vmem>>, vector<1x1x8x128xf32>,
    %c0_13 = arith.constant 0 : index
    %c1 = arith.constant 1 : index
    %c0_14 = arith.constant 0 : index
    %c0_15 = arith.constant 0 : index
    %19 = vector.load %arg4[%c0_13, %c1, %c0_14, %c0_15] : memref<1x3x8x128xf32, #tpu.memory_space<vmem>>, vector<1x1x8x128xf32>
    %20 = vector.shape_cast %19 : vector<1x1x8x128xf32> to vector<8x128xf32>
    %cst_16 = arith.constant dense<0.000000e+00> : vector<8x128xf32>
    %21 = vector.multi_reduction <add>, %11, %cst_16 [0] : vector<2x8x128xf32> to vector<8x128xf32>
    %22 = arith.addf %20, %21 : vector<8x128xf32>
    %c0_17 = arith.constant 0 : index
    %c1_18 = arith.constant 1 : index
    %c0_19 = arith.constant 0 : index
    %c0_20 = arith.constant 0 : index
    %23 = vector.load %arg4[%c0_17, %c1_18, %c0_19, %c0_20] : memref<1x3x8x128xf32, #tpu.memory_space<vmem>>, vector<1x1x8x128xf32>
    %24 = vector.shape_cast %23 : vector<1x1x8x128xf32> to vector<8x128xf32>
    %25 = vector.shape_cast %22 : vector<8x128xf32> to vector<1x1x8x128xf32>
    tpu.vector_store %arg4[%c0_17, %c1_18, %c0_19, %c0_20], %25 {strides = array<i32>} : memref<1x3x8x128xf32, #tpu.memory_space<vmem>>, vector<1x1x8x128xf32>,
    %c0_21 = arith.constant 0 : index
    %c2 = arith.constant 2 : index
    %c0_22 = arith.constant 0 : index
    %c0_23 = arith.constant 0 : index
    %26 = vector.load %arg4[%c0_21, %c2, %c0_22, %c0_23] : memref<1x3x8x128xf32, #tpu.memory_space<vmem>>, vector<1x1x8x128xf32>
    %27 = vector.shape_cast %26 : vector<1x1x8x128xf32> to vector<8x128xf32>
    %28 = arith.mulf %10, %11 : vector<2x8x128xf32>
    %cst_24 = arith.constant dense<0.000000e+00> : vector<8x128xf32>
    %29 = vector.multi_reduction <add>, %28, %cst_24 [0] : vector<2x8x128xf32> to vector<8x128xf32>
    %30 = arith.addf %27, %29 : vector<8x128xf32>
    %c0_25 = arith.constant 0 : index
    %c2_26 = arith.constant 2 : index
    %c0_27 = arith.constant 0 : index
    %c0_28 = arith.constant 0 : index
    %31 = vector.load %arg4[%c0_25, %c2_26, %c0_27, %c0_28] : memref<1x3x8x128xf32, #tpu.memory_space<vmem>>, vector<1x1x8x128xf32>
    %32 = vector.shape_cast %31 : vector<1x1x8x128xf32> to vector<8x128xf32>
    %33 = vector.shape_cast %30 : vector<8x128xf32> to vector<1x1x8x128xf32>
    tpu.vector_store %arg4[%c0_25, %c2_26, %c0_27, %c0_28], %33 {strides = array<i32>} : memref<1x3x8x128xf32, #tpu.memory_space<vmem>>, vector<1x1x8x128xf32>,
    return
  }
  func.func @transform_0(%arg0: i32, %arg1: i32) -> (i32, i32) {
    %c1_i32 = arith.constant 1 : i32
    %0 = arith.muli %arg0, %c1_i32 : i32
    %1 = arith.addi %0, %arg1 : i32
    %c0_i32 = arith.constant 0 : i32
    %2 = arith.minsi %1, %c0_i32 : i32
    %c0_i32_0 = arith.constant 0 : i32
    %c0_i32_1 = arith.constant 0 : i32
    return %2, %c0_i32_0 : i32, i32
  }
  func.func @transform_1(%arg0: i32, %arg1: i32) -> (i32, i32) {
    %c1_i32 = arith.constant 1 : i32
    %0 = arith.muli %arg0, %c1_i32 : i32
    %1 = arith.addi %0, %arg1 : i32
    %c0_i32 = arith.constant 0 : i32
    %2 = arith.minsi %1, %c0_i32 : i32
    %c0_i32_0 = arith.constant 0 : i32
    %c0_i32_1 = arith.constant 0 : i32
    return %2, %c0_i32_0 : i32, i32
  }
  func.func @transform_2(%arg0: i32, %arg1: i32) -> (i32, i32, i32, i32) {
    %c0_i32 = arith.constant 0 : i32
    %c0_i32_0 = arith.constant 0 : i32
    %c0_i32_1 = arith.constant 0 : i32
    %c0_i32_2 = arith.constant 0 : i32
    return %arg0, %c0_i32, %c0_i32_0, %c0_i32_1 : i32, i32, i32, i32
  }
}

</mosaic_0001>

<llo_original>
// kernel: tpu_custom_call.1
$region0: #{tpu_custom_call.1}
  #allocation0 [shape = 'u32[]', space=smem, size = 0x4, offset = 0x4, fixed_abs, tag = 'smem constant byte address 0x4 - core index']
  #allocation1 [shape = 'u32[72,128]{1,0:T(1,128)}', space=vmem, size = 0x9000, scoped, tag = 'internal scratch']
  %s0 = inlined_call_operand.hbm [shape: f32[16,128], index: 0, kind: input, shape index: {}]
  %s1 = inlined_call_operand.hbm [shape: f32[16,128], index: 1, kind: input, shape index: {}]
  %s2 = inlined_call_operand.hbm [shape: f32[1,3,8,128], index: 2, kind: output, shape index: {}]
  %s3 = sld [smem:[#allocation0]]
  $region30: #{tpu_custom_call.1} parent=0
    _
  %s5 = ssub.s32 1, %s3
  %s6 = scalar_select 0, %s5, %s3
  $region1: #{tpu_custom_call.1} parent=0
    #allocation2 [shape = 'u8[8192]{0}', space=vmem, size = 0x2000, scoped, tag = 'input window, operand 0, single buffered']
    #allocation3 [shape = 's32[1]{0}', space=sflag, size = 0x4, scoped, tag = 'scoped memory for tpu_custom_call.1']
    #allocation4 [shape = 's32[1]{0}', space=sflag, size = 0x4, scoped, tag = 'scoped memory for tpu_custom_call.1']
    #allocation5 [shape = 'u8[8192]{0}', space=vmem, size = 0x2000, scoped, tag = 'input window, operand 1, single buffered']
    #allocation6 [shape = 's32[1]{0}', space=sflag, size = 0x4, scoped, tag = 'scoped memory for tpu_custom_call.1']
    #allocation7 [shape = 'u8[12288]{0}', space=vmem, size = 0x3000, scoped, tag = 'output window, operand 0, single buffered']
    %7 = vsyncpa [#allocation3], 0
    %8 = vsyncpa [#allocation6], 0
    %9 = vsyncpa [#allocation4], 0
    // Predicated region
    $region2: #{tpu_custom_call.1} parent=1 // pred_check
      _
    $region3: #{tpu_custom_call.1} parent=1 // pred_check_branch
      %11 = sbr.rel (0) target = $region5
    $region4: #{tpu_custom_call.1} parent=1 // pred_region
      %s12 = sadd.s32 0, 0
      %p13 = scmp.lt.s32.totalorder %s12, 0
      %s14 = scalar_select %p13, %s12, 0
      %s15 = smul.u32 2, %s14
      %17 = vsyncadd [#allocation3], 0
      %s18 = smul.addr %s15, 8
      %s19 = scalar_lea.hbm %s0, %s18
      %s20 = sshll.u32 %s19, 4
      %s21 = int_to_ptr.hbm [resolvable:$true] %s20
      %s22 = sshll.u32 [#allocation2], 4
      %s23 = int_to_ptr.vmem [resolvable:$true] %s22
      %28 = dma.hbm_to_vmem [thread:$0]  %s21, 256, %s23, [#allocation3], 128, 128, 8
    $region5: #{tpu_custom_call.1} parent=1 // pred_fallthru
      _
    // Predicated region
    $region6: #{tpu_custom_call.1} parent=1 // pred_check
      _
    $region7: #{tpu_custom_call.1} parent=1 // pred_check_branch
      %30 = sbr.rel (0) target = $region9
    $region8: #{tpu_custom_call.1} parent=1 // pred_region
      %s31 = sadd.s32 0, 0
      %p32 = scmp.lt.s32.totalorder %s31, 0
      %s33 = scalar_select %p32, %s31, 0
      %s34 = smul.u32 2, %s33
      %36 = vsyncadd [#allocation6], 0
      %s37 = smul.addr %s34, 8
      %s38 = scalar_lea.hbm %s1, %s37
      %s39 = sshll.u32 %s38, 4
      %s40 = int_to_ptr.hbm [resolvable:$true] %s39
      %s41 = sshll.u32 [#allocation5], 4
      %s42 = int_to_ptr.vmem [resolvable:$true] %s41
      %47 = dma.hbm_to_vmem [thread:$0]  %s40, 256, %s42, [#allocation6], 128, 128, 8
    $region9: #{tpu_custom_call.1} parent=1 // pred_fallthru
      _
    // Predicated region
    $region10: #{tpu_custom_call.1} parent=1 // pred_check
      _
    $region11: #{tpu_custom_call.1} parent=1 // pred_check_branch
      %49 = sbr.rel (0) target = $region13
    $region12: #{tpu_custom_call.1} parent=1 // pred_region
      %51 = dma.done [#allocation3], 256
    $region13: #{tpu_custom_call.1} parent=1 // pred_fallthru
      _
    // Predicated region
    $region14: #{tpu_custom_call.1} parent=1 // pred_check
      _
    $region15: #{tpu_custom_call.1} parent=1 // pred_check_branch
      %53 = sbr.rel (0) target = $region17
    $region16: #{tpu_custom_call.1} parent=1 // pred_region
      %55 = dma.done [#allocation6], 256
    $region17: #{tpu_custom_call.1} parent=1 // pred_fallthru
      _
    %s56 = sadd.s32 0, 0
    %p57 = scmp.lt.s32.totalorder %s56, 0
    %s58 = scalar_select %p57, %s56, 0
    %s59 = smul.u32 2, %s58
    %s60 = sadd.s32 0, 0
    %p61 = scmp.lt.s32.totalorder %s60, 0
    %s62 = scalar_select %p61, %s60, 0
    %s63 = smul.u32 2, %s62
    %p64 = scmp.eq.s32.totalorder 0, 0
    // Predicated region
    $region18: #{tpu_custom_call.1} parent=1 // pred_check
      %p65 = pneg %p64
    $region19: #{tpu_custom_call.1} parent=1 // pred_check_branch
      %67 = sbr.rel (%p65) target = $region21
    $region20: #{tpu_custom_call.1} parent=1 // pred_region
      %68 = vst [vmem:[#allocation7] sm:$0xff] 0.0
      %69 = vst [vmem:[#allocation7 + $0x8] sm:$0xff] 0.0
      %70 = vst [vmem:[#allocation7 + $0x10] sm:$0xff] 0.0
    $region21: #{tpu_custom_call.1} parent=1 // pred_fallthru
      _
    %v71 = vld [vmem:[#allocation2] sm:$0xff]
    %v72 = vld [vmem:[#allocation2 + $0x8] sm:$0xff]
    %v73 = vld [vmem:[#allocation5] sm:$0xff]
    %v74 = vld [vmem:[#allocation5 + $0x8] sm:$0xff]
    %v75 = vxor.u32 %v71, 2147483648
    %v76 = vxor.u32 %v72, 2147483648
    %v77 = vmul.f32 %v75, 1.442695
    %v78 = vpow.pop %v77
    %v79 = vmul.f32 %v76, 1.442695
    %v80 = vpow.pop %v79
    %v81 = vadd.f32 %v78, 1.0
    %v82 = vadd.f32 %v80, 1.0
    %v83 = vrcp.pop %v81
    %v84 = vmul.f32 %v81, %v83
    %v85 = vsub.f32 1.0, %v84
    %v86 = vmul.f32 %v83, %v85
    %v87 = vadd.f32 %v83, %v86
    %vm88 = vweird.f32 %v81
    %vm89 = vweird.f32 %v83
    %vm90 = vmor %vm88, %vm89
    %v91 = vsel %vm90, %v83, %v87
    %v92 = vand.u32 2147483647, %v81
    %vm93 = vcmp.eq.f32.partialorder %v92, 8.507059e+37
    %v94 = vand.u32 %v81, 2147483648
    %v95 = vor.u32 1.1754944e-38, %v94
    %v96 = vsel %vm93, %v95, %v91
    %v97 = vmul.f32 1.0, %v96
    %v98 = vrcp.pop %v82
    %v99 = vmul.f32 %v82, %v98
    %v100 = vsub.f32 1.0, %v99
    %v101 = vmul.f32 %v98, %v100
    %v102 = vadd.f32 %v98, %v101
    %vm103 = vweird.f32 %v82
    %vm104 = vweird.f32 %v98
    %vm105 = vmor %vm103, %vm104
    %v106 = vsel %vm105, %v98, %v102
    %v107 = vand.u32 2147483647, %v82
    %vm108 = vcmp.eq.f32.partialorder %v107, 8.507059e+37
    %v109 = vand.u32 %v82, 2147483648
    %v110 = vor.u32 1.1754944e-38, %v109
    %v111 = vsel %vm108, %v110, %v106
    %v112 = vmul.f32 1.0, %v111
    %v113 = vld [vmem:[#allocation7] sm:$0xff]
    %v114 = vadd.f32 %v73, %v74
    %v115 = vadd.f32 %v113, %v114
    %116 = vst [vmem:[#allocation7] sm:$0xff] %v115
    %s117 = scalar_lea.vmem [#allocation7], 8
    %v118 = vld [vmem:[%s117] sm:$0xff]
    %v119 = vadd.f32 %v97, %v112
    %v120 = vadd.f32 %v118, %v119
    %121 = vst [vmem:[%s117] sm:$0xff] %v120
    %s122 = scalar_lea.vmem [#allocation7], 16
    %v123 = vld [vmem:[%s122] sm:$0xff]
    %v124 = vmul.f32 %v73, %v97
    %v125 = vmul.f32 %v74, %v112
    %v126 = vadd.f32 %v124, %v125
    %v127 = vadd.f32 %v123, %v126
    %128 = vst [vmem:[%s122] sm:$0xff] %v127
    // Predicated region
    $region22: #{tpu_custom_call.1} parent=1 // pred_check
      _
    $region23: #{tpu_custom_call.1} parent=1 // pred_check_branch
      %130 = sbr.rel (0) target = $region25
    $region24: #{tpu_custom_call.1} parent=1 // pred_region
      %132 = vsyncadd [#allocation4], 0
      %s133 = sshll.u32 [#allocation7], 4
      %s134 = int_to_ptr.vmem [resolvable:$true] %s133
      %s135 = sshll.u32 %s2, 4
      %s136 = int_to_ptr.hbm [resolvable:$true] %s135
      %141 = dma.vmem_to_hbm [thread:$0]  %s134, 384, %s136, [#allocation4], 128, 128, 8
    $region25: #{tpu_custom_call.1} parent=1 // pred_fallthru
      _
    // Predicated region
    $region26: #{tpu_custom_call.1} parent=1 // pred_check
      _
    $region27: #{tpu_custom_call.1} parent=1 // pred_check_branch
      %143 = sbr.rel (0) target = $region29
    $region28: #{tpu_custom_call.1} parent=1 // pred_region
      %145 = dma.done [#allocation4], 384
    $region29: #{tpu_custom_call.1} parent=1 // pred_fallthru
      _
    %146 = vsyncpa [#allocation3], 1
    %147 = vsyncpa [#allocation6], 1
    %148 = vsyncpa [#allocation4], 1

</llo_original>
